<compile_context>
chip_gen: v7x
topology: tpu7x:2x2x1
jax: 0.10.0
libtpu: 0.0.40
codegen_flags: <defaults>
</compile_context>

<pallas_src>
import functools

import jax
import jax.numpy as jnp
from jax import lax
from jax.experimental import pallas as pl
from jax.experimental.pallas import tpu as pltpu


def a2c_fused_kernel(
    nb_actions,
    x_ref,               # (input_dim, TB)   x^T tile (batch on lanes)
    w1_ref, b1_ref,      # (16, input_dim), (16, 1)   state_net Linear 1 (transposed)
    w2_ref, b2_ref,      # (16, 16), (16, 1)          state_net Linear 2 (transposed)
    wh1_ref, bh1_ref,    # (16, 16), (16, 1)  fused [actor|critic] hidden, w3 folded in
    wh2_ref, bh2_ref,    # (nbA+1, 16), (nbA+1, 1)    fused block-diagonal head
    out_ref,             # (nbA+1, TB) = [policy ; value]^T
):
    x = x_ref[...].astype(jnp.float32)                                     # (D, TB)

    # ---- state_net (w3 pre-folded into wh1): Linear -> ReLU -> Linear -> ReLU ----
    h = jnp.dot(w1_ref[...], x, preferred_element_type=jnp.float32) + b1_ref[...]
    h = jnp.maximum(h, 0.0)                                                # (16, TB)
    h = jnp.dot(w2_ref[...], h, preferred_element_type=jnp.float32) + b2_ref[...]
    h = jnp.maximum(h, 0.0)                                                # (16, TB)

    # ---- fused actor/critic hidden layer (w3 @ [wa1|wc1] folded) ----
    hh = jnp.dot(wh1_ref[...], h, preferred_element_type=jnp.float32) + bh1_ref[...]
    hh = jnp.maximum(hh, 0.0)                                              # (16, TB)

    # ---- fused block-diagonal head: one dot -> [logits ; value]^T ----
    lv = jnp.dot(wh2_ref[...], hh, preferred_element_type=jnp.float32) + bh2_ref[...]
    # lv: (nbA+1, TB); rows [0, nbA) are logits, row nbA is the critic value.

    # Masked softmax over the logit rows (sublane axis); value row passes through.
    row = lax.broadcasted_iota(jnp.int32, lv.shape, 0)
    is_logit = row < nb_actions

    m = jnp.max(jnp.where(is_logit, lv, -jnp.inf), axis=0, keepdims=True)  # (1, TB)
    e = jnp.exp(jnp.where(is_logit, lv - m, 0.0))                          # (nbA+1, TB)
    denom = jnp.sum(jnp.where(is_logit, e, 0.0), axis=0, keepdims=True)    # (1, TB)
    policy = e * pl.reciprocal(denom, approx=False)                        # exact norm

    # Single full-block, lane-dense store of [policy ; value].
    out_ref[...] = jnp.where(is_logit, policy, lv).astype(out_ref.dtype)


def fuse_params(params):
    """Build fused + transposed kernel weights ONCE (outside the kernel)."""
    (w1, b1, w2, b2, w3, b3, wa1, ba1, wa2, ba2, wc1, bc1, wc2, bc2) = params
    nb_actions = wa2.shape[1]

    # Fused actor/critic hidden layer: [wa1 | wc1] -> (16, 16), [ba1 | bc1] -> (1, 16)
    wh1 = jnp.concatenate([wa1, wc1], axis=1)
    bh1 = jnp.concatenate([ba1, bc1], axis=1)

    # Fold the final state_net Linear (no nonlinearity between w3 and wh1):
    #   state_em @ wh1 + bh1 = (h @ w3 + b3) @ wh1 + bh1 = h @ (w3 @ wh1) + (b3 @ wh1 + bh1)
    wh1_f = w3 @ wh1                # (16, 16)
    bh1_f = b3 @ wh1 + bh1          # (1, 16)

    # Block-diagonal second head layer: (16, nbA + 1)
    #   rows 0:8  -> wa2 into columns 0:nbA   (actor)
    #   rows 8:16 -> wc2 into column  nbA     (critic)
    wh2 = jnp.zeros((16, nb_actions + 1), jnp.float32)
    wh2 = wh2.at[:8, :nb_actions].set(wa2)
    wh2 = wh2.at[8:, nb_actions:].set(wc2)
    bh2 = jnp.concatenate([ba2, bc2], axis=1)

    # Transpose everything for the batch-on-lanes kernel layout.
    fused = (w1.T, b1.T, w2.T, b2.T, wh1_f.T, bh1_f.T, wh2.T, bh2.T)
    fused = tuple(jnp.asarray(a, jnp.float32) for a in fused)
    return fused, nb_actions


def _pick_batch_tile(B, batch_tile):
    """Batch lives on the lane axis -> tiles are multiples of 128 (or the full B).
    For large B, guarantee >= 2 grid steps so the 'parallel' axis can shard
    across v7x's two TensorCores."""
    if B <= 256:
        return B
    half = pl.cdiv(B, 2)
    half_up = ((half + 127) // 128) * 128
    tb = min(batch_tile, half_up)
    return max(128, (tb // 128) * 128)


def a2c_forward(x, fused_params, nb_actions, *, batch_tile=4096):
    """Runs the fused forward kernel; returns (policy (B, nbA), value (B, 1)).

    `x` is (B, input_dim); it may be float32 or bfloat16 (bf16 halves the HBM
    read traffic — the kernel accumulates in f32 either way).
    """
    B, input_dim = x.shape
    nbp1 = nb_actions + 1

    # Batch-on-lanes: feed x^T.  (Ideally upstream producers emit (D, B) directly;
    # this transpose is pure layout plumbing.)
    xT = x.T                                                # (input_dim, B)

    tb = _pick_batch_tile(B, batch_tile)
    grid = (pl.cdiv(B, tb),)                                # no host-side padding

    # Weights/biases: full-array blocks with a constant index_map -> VMEM-resident.
    weight_specs = [pl.BlockSpec(w.shape, lambda i: (0, 0)) for w in fused_params]
    in_specs = [pl.BlockSpec((input_dim, tb), lambda i: (0, i))] + weight_specs
    out_spec = pl.BlockSpec((nbp1, tb), lambda i: (0, i))
    out_shape = jax.ShapeDtypeStruct((nbp1, B), jnp.float32)

    flops = 2 * B * (input_dim * 16 + 16 * 16 + 16 * 16 + 16 * nbp1)
    weight_bytes = sum(int(w.size) * w.dtype.itemsize for w in fused_params)
    cost = pl.CostEstimate(
        flops=flops,
        transcendentals=B * nb_actions,
        bytes_accessed=B * input_dim * x.dtype.itemsize + B * nbp1 * 4 + weight_bytes,
    )

    fused_out = pl.pallas_call(
        functools.partial(a2c_fused_kernel, nb_actions),
        out_shape=out_shape,
        grid=grid,
        in_specs=in_specs,
        out_specs=out_spec,
        compiler_params=pltpu.CompilerParams(dimension_semantics=("parallel",)),
        cost_estimate=cost,
    )(xT, *fused_params)

    policy = fused_out[:nb_actions, :].T                    # (B, nbA)
    value = fused_out[nb_actions:, :].T                     # (B, 1)
    return policy, value


def init_params(key, input_dim, nb_actions):
    """Deterministic param init. Weights are (in, out); biases are (1, out)."""
    def linear(key, fan_in, fan_out):
        kw, kb = jax.random.split(key)
        bound = 1.0 / jnp.sqrt(jnp.float32(fan_in))
        w = jax.random.uniform(kw, (fan_in, fan_out), jnp.float32, -bound, bound)
        b = jax.random.uniform(kb, (1, fan_out), jnp.float32, -bound, bound)
        return w, b

    keys = jax.random.split(key, 7)
    w1, b1 = linear(keys[0], input_dim, 16)
    w2, b2 = linear(keys[1], 16, 16)
    w3, b3 = linear(keys[2], 16, 16)
    wa1, ba1 = linear(keys[3], 16, 8)
    wa2, ba2 = linear(keys[4], 8, nb_actions)
    wc1, bc1 = linear(keys[5], 16, 8)
    wc2, bc2 = linear(keys[6], 8, 1)
    return (w1, b1, w2, b2, w3, b3, wa1, ba1, wa2, ba2, wc1, bc1, wc2, bc2)


def a2c_forward_ref(x, params):
    """Pure-JAX reference (matches the PyTorch module semantics)."""
    (w1, b1, w2, b2, w3, b3, wa1, ba1, wa2, ba2, wc1, bc1, wc2, bc2) = params
    h = jnp.maximum(x @ w1 + b1, 0.0)
    h = jnp.maximum(h @ w2 + b2, 0.0)
    s = h @ w3 + b3
    a = jnp.maximum(s @ wa1 + ba1, 0.0)
    policy = jax.nn.softmax(a @ wa2 + ba2, axis=1)
    c = jnp.maximum(s @ wc1 + bc1, 0.0)
    value = c @ wc2 + bc2
    return policy, value


# TODO(synk): the module's torch.optim.Adam / training step is not part of the
# forward pass and is not implemented here.

if __name__ == "__main__":
    key = jax.random.PRNGKey(0)
    k_x, k_p, k_x2 = jax.random.split(key, 3)

    batch = 8
    input_dim = 32
    nb_actions = 4

    x = jax.random.normal(k_x, (batch, input_dim), dtype=jnp.float32)
    params = init_params(k_p, input_dim, nb_actions)

    # Fused/transposed weights are built once, outside the kernel.
    fused_params, nb_a = fuse_params(params)
    fused_params = jax.tree_util.tree_map(jax.block_until_ready, fused_params)

    # ---- small-batch path (single full block) ----
    policy, value = a2c_forward(x, fused_params, nb_a)
    jax.block_until_ready((policy, value))

    policy_ref, value_ref = a2c_forward_ref(x, params)
    assert policy.shape == (batch, nb_actions)
    assert value.shape == (batch, 1)
    assert jnp.allclose(policy, policy_ref, atol=1e-4, rtol=1e-4)
    assert jnp.allclose(value, value_ref, atol=1e-4, rtol=1e-4)
    assert jnp.allclose(jnp.sum(policy, axis=1), 1.0, atol=1e-5)

    # ---- multi-block path (2 grid steps, ragged last block, no host padding) ----
    B2 = 300
    x2 = jax.random.normal(k_x2, (B2, input_dim), dtype=jnp.float32)
    p2, v2 = a2c_forward(x2, fused_params, nb_a)
    jax.block_until_ready((p2, v2))
    p2_ref, v2_ref = a2c_forward_ref(x2, params)
    assert p2.shape == (B2, nb_actions) and v2.shape == (B2, 1)
    assert jnp.allclose(p2, p2_ref, atol=1e-4, rtol=1e-4)
    assert jnp.allclose(v2, v2_ref, atol=1e-4, rtol=1e-4)

    print("KERNEL_OK")
</pallas_src>

<mosaic_0001>
module attributes {stable_mosaic.version = 11 : i64} {
  func.func @a2c_fused_kernel(%arg0: i32, %arg1: memref<32x8xf32, #tpu.memory_space<vmem>>, %arg2: memref<16x32xf32, #tpu.memory_space<vmem>>, %arg3: memref<16x1xf32, #tpu.memory_space<vmem>>, %arg4: memref<16x16xf32, #tpu.memory_space<vmem>>, %arg5: memref<16x1xf32, #tpu.memory_space<vmem>>, %arg6: memref<16x16xf32, #tpu.memory_space<vmem>>, %arg7: memref<16x1xf32, #tpu.memory_space<vmem>>, %arg8: memref<5x16xf32, #tpu.memory_space<vmem>>, %arg9: memref<5x1xf32, #tpu.memory_space<vmem>>, %arg10: memref<5x8xf32, #tpu.memory_space<vmem>>) attributes {dimension_semantics = [#tpu.dimension_semantics<parallel>], iteration_bounds = array<i64: 1>, scalar_prefetch = 0 : i64, scratch_operands = 0 : i64, tpu.core_type = #tpu.core_type<tc>, window_params = [{transform_indices = @transform_0, window_bounds = array<i64: 32, 8>}, {pipeline_mode = #tpu.pipeline_mode<synchronous>, transform_indices = @transform_1, window_bounds = array<i64: 16, 32>}, {pipeline_mode = #tpu.pipeline_mode<synchronous>, transform_indices = @transform_2, window_bounds = array<i64: 16, 1>}, {pipeline_mode = #tpu.pipeline_mode<synchronous>, transform_indices = @transform_3, window_bounds = array<i64: 16, 16>}, {pipeline_mode = #tpu.pipeline_mode<synchronous>, transform_indices = @transform_4, window_bounds = array<i64: 16, 1>}, {pipeline_mode = #tpu.pipeline_mode<synchronous>, transform_indices = @transform_5, window_bounds = array<i64: 16, 16>}, {pipeline_mode = #tpu.pipeline_mode<synchronous>, transform_indices = @transform_6, window_bounds = array<i64: 16, 1>}, {pipeline_mode = #tpu.pipeline_mode<synchronous>, transform_indices = @transform_7, window_bounds = array<i64: 5, 16>}, {pipeline_mode = #tpu.pipeline_mode<synchronous>, transform_indices = @transform_8, window_bounds = array<i64: 5, 1>}, {transform_indices = @transform_9, window_bounds = array<i64: 5, 8>}]} {
    %c0 = arith.constant 0 : index
    %c0_0 = arith.constant 0 : index
    %0 = vector.load %arg1[%c0, %c0_0] : memref<32x8xf32, #tpu.memory_space<vmem>>, vector<32x8xf32>
    %c0_1 = arith.constant 0 : index
    %c0_2 = arith.constant 0 : index
    %1 = vector.load %arg2[%c0_1, %c0_2] : memref<16x32xf32, #tpu.memory_space<vmem>>, vector<16x32xf32>
    %cst = arith.constant dense<0.000000e+00> : vector<16x8xf32>
    %2 = tpu.matmul %1, %0, %cst {dimension_numbers = #tpu.dot_dimension_numbers<[1], [0], [0], [1], [0, 0, 1, 1], [], []>} : vector<16x32xf32>, vector<32x8xf32>, vector<16x8xf32> -> vector<16x8xf32>
    %c0_3 = arith.constant 0 : index
    %c0_4 = arith.constant 0 : index
    %3 = vector.load %arg3[%c0_3, %c0_4] : memref<16x1xf32, #tpu.memory_space<vmem>>, vector<16x1xf32>
    %4 = vector.broadcast %3 : vector<16x1xf32> to vector<16x8xf32>
    %5 = arith.addf %2, %4 : vector<16x8xf32>
    %cst_5 = arith.constant 0.000000e+00 : f32
    %6 = vector.broadcast %cst_5 : f32 to vector<16x8xf32>
    %7 = arith.maximumf %5, %6 : vector<16x8xf32>
    %c0_6 = arith.constant 0 : index
    %c0_7 = arith.constant 0 : index
    %8 = vector.load %arg4[%c0_6, %c0_7] : memref<16x16xf32, #tpu.memory_space<vmem>>, vector<16x16xf32>
    %cst_8 = arith.constant dense<0.000000e+00> : vector<16x8xf32>
    %9 = tpu.matmul %8, %7, %cst_8 {dimension_numbers = #tpu.dot_dimension_numbers<[1], [0], [0], [1], [0, 0, 1, 1], [], []>} : vector<16x16xf32>, vector<16x8xf32>, vector<16x8xf32> -> vector<16x8xf32>
    %c0_9 = arith.constant 0 : index
    %c0_10 = arith.constant 0 : index
    %10 = vector.load %arg5[%c0_9, %c0_10] : memref<16x1xf32, #tpu.memory_space<vmem>>, vector<16x1xf32>
    %11 = vector.broadcast %10 : vector<16x1xf32> to vector<16x8xf32>
    %12 = arith.addf %9, %11 : vector<16x8xf32>
    %cst_11 = arith.constant 0.000000e+00 : f32
    %13 = vector.broadcast %cst_11 : f32 to vector<16x8xf32>
    %14 = arith.maximumf %12, %13 : vector<16x8xf32>
    %c0_12 = arith.constant 0 : index
    %c0_13 = arith.constant 0 : index
    %15 = vector.load %arg6[%c0_12, %c0_13] : memref<16x16xf32, #tpu.memory_space<vmem>>, vector<16x16xf32>
    %cst_14 = arith.constant dense<0.000000e+00> : vector<16x8xf32>
    %16 = tpu.matmul %15, %14, %cst_14 {dimension_numbers = #tpu.dot_dimension_numbers<[1], [0], [0], [1], [0, 0, 1, 1], [], []>} : vector<16x16xf32>, vector<16x8xf32>, vector<16x8xf32> -> vector<16x8xf32>
    %c0_15 = arith.constant 0 : index
    %c0_16 = arith.constant 0 : index
    %17 = vector.load %arg7[%c0_15, %c0_16] : memref<16x1xf32, #tpu.memory_space<vmem>>, vector<16x1xf32>
    %18 = vector.broadcast %17 : vector<16x1xf32> to vector<16x8xf32>
    %19 = arith.addf %16, %18 : vector<16x8xf32>
    %cst_17 = arith.constant 0.000000e+00 : f32
    %20 = vector.broadcast %cst_17 : f32 to vector<16x8xf32>
    %21 = arith.maximumf %19, %20 : vector<16x8xf32>
    %c0_18 = arith.constant 0 : index
    %c0_19 = arith.constant 0 : index
    %22 = vector.load %arg8[%c0_18, %c0_19] : memref<5x16xf32, #tpu.memory_space<vmem>>, vector<5x16xf32>
    %cst_20 = arith.constant dense<0.000000e+00> : vector<5x8xf32>
    %23 = tpu.matmul %22, %21, %cst_20 {dimension_numbers = #tpu.dot_dimension_numbers<[1], [0], [0], [1], [0, 0, 1, 1], [], []>} : vector<5x16xf32>, vector<16x8xf32>, vector<5x8xf32> -> vector<5x8xf32>
    %c0_21 = arith.constant 0 : index
    %c0_22 = arith.constant 0 : index
    %24 = vector.load %arg9[%c0_21, %c0_22] : memref<5x1xf32, #tpu.memory_space<vmem>>, vector<5x1xf32>
    %25 = vector.broadcast %24 : vector<5x1xf32> to vector<5x8xf32>
    %26 = arith.addf %23, %25 : vector<5x8xf32>
    %27 = tpu.iota {dimensions = array<i32: 0>} : vector<5x8xi32>
    %c4_i32 = arith.constant 4 : i32
    %28 = vector.broadcast %c4_i32 : i32 to vector<5x8xi32>
    %29 = arith.cmpi slt, %27, %28 : vector<5x8xi32>
    %cst_23 = arith.constant 0xFF800000 : f32
    %30 = vector.broadcast %cst_23 : f32 to vector<5x8xf32>
    %31 = arith.select %29, %26, %30 : vector<5x8xi1>, vector<5x8xf32>
    %cst_24 = arith.constant dense<0xFF800000> : vector<8xf32>
    %32 = vector.multi_reduction <maximumf>, %31, %cst_24 [0] : vector<5x8xf32> to vector<8xf32>
    %33 = vector.shape_cast %32 : vector<8xf32> to vector<1x8xf32>
    %34 = vector.broadcast %33 : vector<1x8xf32> to vector<5x8xf32>
    %35 = arith.subf %26, %34 : vector<5x8xf32>
    %cst_25 = arith.constant 0.000000e+00 : f32
    %36 = vector.broadcast %cst_25 : f32 to vector<5x8xf32>
    %37 = arith.select %29, %35, %36 : vector<5x8xi1>, vector<5x8xf32>
    %38 = math.exp %37 : vector<5x8xf32>
    %cst_26 = arith.constant 0.000000e+00 : f32
    %39 = vector.broadcast %cst_26 : f32 to vector<5x8xf32>
    %40 = arith.select %29, %38, %39 : vector<5x8xi1>, vector<5x8xf32>
    %cst_27 = arith.constant dense<0.000000e+00> : vector<8xf32>
    %41 = vector.multi_reduction <add>, %40, %cst_27 [0] : vector<5x8xf32> to vector<8xf32>
    %42 = vector.shape_cast %41 : vector<8xf32> to vector<1x8xf32>
    %43 = tpu.reciprocal %42 : vector<1x8xf32> -> vector<1x8xf32>
    %44 = vector.broadcast %43 : vector<1x8xf32> to vector<5x8xf32>
    %45 = arith.mulf %38, %44 : vector<5x8xf32>
    %46 = arith.select %29, %45, %26 : vector<5x8xi1>, vector<5x8xf32>
    %c0_28 = arith.constant 0 : index
    %c0_29 = arith.constant 0 : index
    %47 = vector.load %arg10[%c0_28, %c0_29] : memref<5x8xf32, #tpu.memory_space<vmem>>, vector<5x8xf32>
    tpu.vector_store %arg10[%c0_28, %c0_29], %46 {strides = array<i32>} : memref<5x8xf32, #tpu.memory_space<vmem>>, vector<5x8xf32>,
    return
  }
  func.func @transform_0(%arg0: i32) -> (i32, i32) {
    %c0_i32 = arith.constant 0 : i32
    %c0_i32_0 = arith.constant 0 : i32
    return %c0_i32, %arg0 : i32, i32
  }
  func.func @transform_1(%arg0: i32) -> (i32, i32) {
    %c0_i32 = arith.constant 0 : i32
    %c0_i32_0 = arith.constant 0 : i32
    %c0_i32_1 = arith.constant 0 : i32
    return %c0_i32, %c0_i32_0 : i32, i32
  }
  func.func @transform_2(%arg0: i32) -> (i32, i32) {
    %c0_i32 = arith.constant 0 : i32
    %c0_i32_0 = arith.constant 0 : i32
    %c0_i32_1 = arith.constant 0 : i32
    return %c0_i32, %c0_i32_0 : i32, i32
  }
  func.func @transform_3(%arg0: i32) -> (i32, i32) {
    %c0_i32 = arith.constant 0 : i32
    %c0_i32_0 = arith.constant 0 : i32
    %c0_i32_1 = arith.constant 0 : i32
    return %c0_i32, %c0_i32_0 : i32, i32
  }
  func.func @transform_4(%arg0: i32) -> (i32, i32) {
    %c0_i32 = arith.constant 0 : i32
    %c0_i32_0 = arith.constant 0 : i32
    %c0_i32_1 = arith.constant 0 : i32
    return %c0_i32, %c0_i32_0 : i32, i32
  }
  func.func @transform_5(%arg0: i32) -> (i32, i32) {
    %c0_i32 = arith.constant 0 : i32
    %c0_i32_0 = arith.constant 0 : i32
    %c0_i32_1 = arith.constant 0 : i32
    return %c0_i32, %c0_i32_0 : i32, i32
  }
  func.func @transform_6(%arg0: i32) -> (i32, i32) {
    %c0_i32 = arith.constant 0 : i32
    %c0_i32_0 = arith.constant 0 : i32
    %c0_i32_1 = arith.constant 0 : i32
    return %c0_i32, %c0_i32_0 : i32, i32
  }
  func.func @transform_7(%arg0: i32) -> (i32, i32) {
    %c0_i32 = arith.constant 0 : i32
    %c0_i32_0 = arith.constant 0 : i32
    %c0_i32_1 = arith.constant 0 : i32
    return %c0_i32, %c0_i32_0 : i32, i32
  }
  func.func @transform_8(%arg0: i32) -> (i32, i32) {
    %c0_i32 = arith.constant 0 : i32
    %c0_i32_0 = arith.constant 0 : i32
    %c0_i32_1 = arith.constant 0 : i32
    return %c0_i32, %c0_i32_0 : i32, i32
  }
  func.func @transform_9(%arg0: i32) -> (i32, i32) {
    %c0_i32 = arith.constant 0 : i32
    %c0_i32_0 = arith.constant 0 : i32
    return %c0_i32, %arg0 : i32, i32
  }
}

</mosaic_0001>

<llo_original>
// kernel: tpu_custom_call.1
$region0: #{tpu_custom_call.1}
  #allocation0 [shape = 'u32[]', space=smem, size = 0x4, offset = 0x4, fixed_abs, tag = 'smem constant byte address 0x4 - core index']
  #allocation1 [shape = 'u32[144,128]{1,0:T(1,128)}', space=vmem, size = 0x12000, scoped, tag = 'internal scratch']
  %s0 = inlined_call_operand.vmem [shape: f32[32,8], index: 0, kind: input, shape index: {}]
  %s1 = inlined_call_operand.vmem [shape: f32[16,32], index: 1, kind: input, shape index: {}]
  %s2 = inlined_call_operand.vmem [shape: f32[16,1], index: 2, kind: input, shape index: {}]
  %s3 = inlined_call_operand.vmem [shape: f32[16,16], index: 3, kind: input, shape index: {}]
  %s4 = inlined_call_operand.vmem [shape: f32[16,1], index: 4, kind: input, shape index: {}]
  %s5 = inlined_call_operand.vmem [shape: f32[16,16], index: 5, kind: input, shape index: {}]
  %s6 = inlined_call_operand.vmem [shape: f32[16,1], index: 6, kind: input, shape index: {}]
  %s7 = inlined_call_operand.vmem [shape: f32[5,16], index: 7, kind: input, shape index: {}]
  %s8 = inlined_call_operand.vmem [shape: f32[5,1], index: 8, kind: input, shape index: {}]
  %s9 = inlined_call_operand.hbm [shape: f32[5,8], index: 9, kind: output, shape index: {}]
  %s10 = sld [smem:[#allocation0]]
  $region46: #{tpu_custom_call.1} parent=0
    _
  %s12 = ssub.s32 1, %s10
  %s13 = scalar_select 0, %s12, %s10
  $region1: #{tpu_custom_call.1} parent=0
    #allocation2 [shape = 'u8[4096]{0}', space=vmem, size = 0x1000, scoped, tag = 'output window, operand 0, single buffered']
    #allocation3 [shape = 's32[1]{0}', space=sflag, size = 0x4, scoped, tag = 'scoped memory for tpu_custom_call.1']
    %14 = vsyncpa [#allocation3], 0
    // Predicated region
    $region2: #{tpu_custom_call.1} parent=1 // pred_check
      _
    $region3: #{tpu_custom_call.1} parent=1 // pred_check_branch
      %16 = sbr.rel (0) target = $region5
    $region4: #{tpu_custom_call.1} parent=1 // pred_region
      _
    $region5: #{tpu_custom_call.1} parent=1 // pred_fallthru
      _
    // Predicated region
    $region6: #{tpu_custom_call.1} parent=1 // pred_check
      _
    $region7: #{tpu_custom_call.1} parent=1 // pred_check_branch
      %18 = sbr.rel (0) target = $region9
    $region8: #{tpu_custom_call.1} parent=1 // pred_region
      _
    $region9: #{tpu_custom_call.1} parent=1 // pred_fallthru
      _
    // Predicated region
    $region10: #{tpu_custom_call.1} parent=1 // pred_check
      _
    $region11: #{tpu_custom_call.1} parent=1 // pred_check_branch
      %20 = sbr.rel (0) target = $region13
    $region12: #{tpu_custom_call.1} parent=1 // pred_region
      _
    $region13: #{tpu_custom_call.1} parent=1 // pred_fallthru
      _
    // Predicated region
    $region14: #{tpu_custom_call.1} parent=1 // pred_check
      _
    $region15: #{tpu_custom_call.1} parent=1 // pred_check_branch
      %22 = sbr.rel (0) target = $region17
    $region16: #{tpu_custom_call.1} parent=1 // pred_region
      _
    $region17: #{tpu_custom_call.1} parent=1 // pred_fallthru
      _
    // Predicated region
    $region18: #{tpu_custom_call.1} parent=1 // pred_check
      _
    $region19: #{tpu_custom_call.1} parent=1 // pred_check_branch
      %24 = sbr.rel (0) target = $region21
    $region20: #{tpu_custom_call.1} parent=1 // pred_region
      _
    $region21: #{tpu_custom_call.1} parent=1 // pred_fallthru
      _
    // Predicated region
    $region22: #{tpu_custom_call.1} parent=1 // pred_check
      _
    $region23: #{tpu_custom_call.1} parent=1 // pred_check_branch
      %26 = sbr.rel (0) target = $region25
    $region24: #{tpu_custom_call.1} parent=1 // pred_region
      _
    $region25: #{tpu_custom_call.1} parent=1 // pred_fallthru
      _
    // Predicated region
    $region26: #{tpu_custom_call.1} parent=1 // pred_check
      _
    $region27: #{tpu_custom_call.1} parent=1 // pred_check_branch
      %28 = sbr.rel (0) target = $region29
    $region28: #{tpu_custom_call.1} parent=1 // pred_region
      _
    $region29: #{tpu_custom_call.1} parent=1 // pred_fallthru
      _
    // Predicated region
    $region30: #{tpu_custom_call.1} parent=1 // pred_check
      _
    $region31: #{tpu_custom_call.1} parent=1 // pred_check_branch
      %30 = sbr.rel (0) target = $region33
    $region32: #{tpu_custom_call.1} parent=1 // pred_region
      _
    $region33: #{tpu_custom_call.1} parent=1 // pred_fallthru
      _
    // Predicated region
    $region34: #{tpu_custom_call.1} parent=1 // pred_check
      _
    $region35: #{tpu_custom_call.1} parent=1 // pred_check_branch
      %32 = sbr.rel (0) target = $region37
    $region36: #{tpu_custom_call.1} parent=1 // pred_region
      _
    $region37: #{tpu_custom_call.1} parent=1 // pred_fallthru
      _
    %v33 = vld [vmem:[%s0] sm:$0xff]
    %v34 = vld [vmem:[%s0 + $0x8] sm:$0xff]
    %v35 = vld [vmem:[%s0 + $0x10] sm:$0xff]
    %v36 = vld [vmem:[%s0 + $0x18] sm:$0xff]
    %v37 = vld [vmem:[%s1] sm:$0xff]
    %v38 = vld [vmem:[%s1 + $0x8] sm:$0xff]
    %v39 = vld [vmem:[%s2] sm:$0xff]
    %v40 = vld [vmem:[%s2 + $0x8] sm:$0xff]
    %42 = vset.pattern.permute.xlu0 0
    %43 = vperm.xlu0 %42, %v39
    %v44 = vpop.permute.xlu0 %43
    %47 = vset.pattern.permute.xlu0 0
    %48 = vperm.xlu0 %47, %v40
    %v49 = vpop.permute.xlu0 %48
    %vm51 = vcmask 261120
    %v53 = vsel %vm51, %v37, 0
    %v56 = vsel %vm51, %v38, 0
    %58 = vmatprep.subr.mxu0 0.0
    %59 = vmatpush1.msra.mxu0 %v33
    %60 = vmatprep.subr.mxu0 0.0
    %61 = vmatpush1.msra.mxu0 %v34
    %62 = vmatprep.subr.mxu0 0.0
    %63 = vmatpush1.msra.mxu0 %v35
    %64 = vmatprep.subr.mxu0 0.0
    %65 = vmatpush1.msra.mxu0 %v36
    %66 = vmatprep.subr.mxu0 0.0
    %67 = vmatpush1.msra.mxu0 0.0
    %68 = vmatprep.subr.mxu0 0.0
    %69 = vmatpush1.msra.mxu0 0.0
    %70 = vmatprep.subr.mxu0 0.0
    %71 = vmatpush1.msra.mxu0 0.0
    %72 = vmatprep.subr.mxu0 0.0
    %73 = vmatpush1.msra.mxu0 0.0
    %74 = vmatprep.subr.mxu0 0.0
    %75 = vmatpush1.msra.mxu0 0.0
    %76 = vmatprep.subr.mxu0 0.0
    %77 = vmatpush1.msra.mxu0 0.0
    %78 = vmatprep.subr.mxu0 0.0
    %79 = vmatpush1.msra.mxu0 0.0
    %80 = vmatprep.subr.mxu0 0.0
    %81 = vmatpush1.msra.mxu0 0.0
    %82 = vmatprep.subr.mxu0 0.0
    %83 = vmatpush1.msra.mxu0 0.0
    %84 = vmatprep.subr.mxu0 0.0
    %85 = vmatpush1.msra.mxu0 0.0
    %86 = vmatprep.subr.mxu0 0.0
    %87 = vmatpush1.msra.mxu0 0.0
    %88 = vmatprep.subr.mxu0 0.0
    %89 = vmatpush1.msra.mxu0 0.0
    %90 = vmatprep.subr.mxu0 0.0
    %91 = vmatpush1.msra.mxu0 0.0
    %92 = vmatprep.subr.mxu0 0.0
    %93 = vmatpush1.msra.mxu0 0.0
    %94 = vmatprep.subr.mxu0 0.0
    %95 = vmatpush1.msra.mxu0 0.0
    %96 = vmatprep.subr.mxu0 0.0
    %97 = vmatpush1.msra.mxu0 0.0
    %98 = vmatprep.subr.mxu0 0.0
    %99 = vmatpush1.msra.mxu0 0.0
    %100 = vmatprep.subr.mxu0 0.0
    %101 = vmatpush1.msra.mxu0 0.0
    %102 = vmatprep.subr.mxu0 0.0
    %103 = vmatpush1.msra.mxu0 0.0
    %104 = vmatprep.subr.mxu0 0.0
    %105 = vmatpush1.msra.mxu0 0.0
    %106 = vmatprep.subr.mxu0 0.0
    %107 = vmatpush1.msra.mxu0 0.0
    %108 = vmatprep.subr.mxu0 0.0
    %109 = vmatpush1.msra.mxu0 0.0
    %110 = vmatprep.subr.mxu0 0.0
    %111 = vmatpush1.msra.mxu0 0.0
    %112 = vmatprep.subr.mxu0 0.0
    %113 = vmatpush1.msra.mxu0 0.0
    %114 = vmatprep.subr.mxu0 0.0
    %115 = vmatpush1.msra.mxu0 0.0
    %116 = vmatprep.subr.mxu0 0.0
    %117 = vmatpush1.msra.mxu0 0.0
    %118 = vmatprep.subr.mxu0 0.0
    %119 = vmatpush1.msra.mxu0 0.0
    %120 = vmatprep.subr.mxu0 0.0
    %121 = vmatpush1.msra.mxu0 0.0
    %122 = vmatprep.mubr.f32.mxu0 0.0
    %123 = vmatmul.mubr.f32.gmra.mrb[0].mxu0 %v53
    %v124 = vpop.f32.mrb[0].mxu0
    %v125 = vadd.f32 %v44, %v124
    %v126 = vpop.f32.mrb[0].mxu0
    %127 = vmatprep.mubr.f32.mxu0 0.0
    %128 = vmatmul.mubr.f32.gmra.mrb[0].mxu0 %v56
    %v129 = vpop.f32.mrb[0].mxu0
    %v130 = vadd.f32 %v49, %v129
    %v131 = vpop.f32.mrb[0].mxu0
    %132 = vdwg.mxu0
    %v133 = vmax.f32 %v125, 0.0
    %v134 = vmax.f32 %v130, 0.0
    %v135 = vld [vmem:[%s3] sm:$0xff]
    %v136 = vld [vmem:[%s3 + $0x8] sm:$0xff]
    %v137 = vld [vmem:[%s4] sm:$0xff]
    %v138 = vld [vmem:[%s4 + $0x8] sm:$0xff]
    %140 = vset.pattern.permute.xlu0 0
    %141 = vperm.xlu0 %140, %v137
    %v142 = vpop.permute.xlu0 %141
    %145 = vset.pattern.permute.xlu0 0
    %146 = vperm.xlu0 %145, %v138
    %v147 = vpop.permute.xlu0 %146
    %vm149 = vcmask 130048
    %v151 = vsel %vm149, %v135, 0
    %v154 = vsel %vm149, %v136, 0
    %156 = vmatprep.subr.mxu0 0.0
    %157 = vmatpush1.msra.mxu0 %v133
    %158 = vmatprep.subr.mxu0 0.0
    %159 = vmatpush1.msra.mxu0 %v134
    %160 = vmatprep.subr.mxu0 0.0
    %161 = vmatpush1.msra.mxu0 0.0
    %162 = vmatprep.subr.mxu0 0.0
    %163 = vmatpush1.msra.mxu0 0.0
    %164 = vmatprep.subr.mxu0 0.0
    %165 = vmatpush1.msra.mxu0 0.0
    %166 = vmatprep.subr.mxu0 0.0
    %167 = vmatpush1.msra.mxu0 0.0
    %168 = vmatprep.subr.mxu0 0.0
    %169 = vmatpush1.msra.mxu0 0.0
    %170 = vmatprep.subr.mxu0 0.0
    %171 = vmatpush1.msra.mxu0 0.0
    %172 = vmatprep.subr.mxu0 0.0
    %173 = vmatpush1.msra.mxu0 0.0
    %174 = vmatprep.subr.mxu0 0.0
    %175 = vmatpush1.msra.mxu0 0.0
    %176 = vmatprep.subr.mxu0 0.0
    %177 = vmatpush1.msra.mxu0 0.0
    %178 = vmatprep.subr.mxu0 0.0
    %179 = vmatpush1.msra.mxu0 0.0
    %180 = vmatprep.subr.mxu0 0.0
    %181 = vmatpush1.msra.mxu0 0.0
    %182 = vmatprep.subr.mxu0 0.0
    %183 = vmatpush1.msra.mxu0 0.0
    %184 = vmatprep.subr.mxu0 0.0
    %185 = vmatpush1.msra.mxu0 0.0
    %186 = vmatprep.subr.mxu0 0.0
    %187 = vmatpush1.msra.mxu0 0.0
    %188 = vmatprep.subr.mxu0 0.0
    %189 = vmatpush1.msra.mxu0 0.0
    %190 = vmatprep.subr.mxu0 0.0
    %191 = vmatpush1.msra.mxu0 0.0
    %192 = vmatprep.subr.mxu0 0.0
    %193 = vmatpush1.msra.mxu0 0.0
    %194 = vmatprep.subr.mxu0 0.0
    %195 = vmatpush1.msra.mxu0 0.0
    %196 = vmatprep.subr.mxu0 0.0
    %197 = vmatpush1.msra.mxu0 0.0
    %198 = vmatprep.subr.mxu0 0.0
    %199 = vmatpush1.msra.mxu0 0.0
    %200 = vmatprep.subr.mxu0 0.0
    %201 = vmatpush1.msra.mxu0 0.0
    %202 = vmatprep.subr.mxu0 0.0
    %203 = vmatpush1.msra.mxu0 0.0
    %204 = vmatprep.subr.mxu0 0.0
    %205 = vmatpush1.msra.mxu0 0.0
    %206 = vmatprep.subr.mxu0 0.0
    %207 = vmatpush1.msra.mxu0 0.0
    %208 = vmatprep.subr.mxu0 0.0
    %209 = vmatpush1.msra.mxu0 0.0
    %210 = vmatprep.subr.mxu0 0.0
    %211 = vmatpush1.msra.mxu0 0.0
    %212 = vmatprep.subr.mxu0 0.0
    %213 = vmatpush1.msra.mxu0 0.0
    %214 = vmatprep.subr.mxu0 0.0
    %215 = vmatpush1.msra.mxu0 0.0
    %216 = vmatprep.subr.mxu0 0.0
    %217 = vmatpush1.msra.mxu0 0.0
    %218 = vmatprep.subr.mxu0 0.0
    %219 = vmatpush1.msra.mxu0 0.0
    %220 = vmatprep.mubr.f32.mxu0 0.0
    %221 = vmatmul.mubr.f32.gmra.mrb[0].mxu0 %v151
    %v222 = vpop.f32.mrb[0].mxu0
    %v223 = vadd.f32 %v142, %v222
    %v224 = vpop.f32.mrb[0].mxu0
    %225 = vmatprep.mubr.f32.mxu0 0.0
    %226 = vmatmul.mubr.f32.gmra.mrb[0].mxu0 %v154
    %v227 = vpop.f32.mrb[0].mxu0
    %v228 = vadd.f32 %v147, %v227
    %v229 = vpop.f32.mrb[0].mxu0
    %230 = vdwg.mxu0
    %v231 = vmax.f32 %v223, 0.0
    %v232 = vmax.f32 %v228, 0.0
    %v233 = vld [vmem:[%s5] sm:$0xff]
    %v234 = vld [vmem:[%s5 + $0x8] sm:$0xff]
    %v235 = vld [vmem:[%s6] sm:$0xff]
    %v236 = vld [vmem:[%s6 + $0x8] sm:$0xff]
    %238 = vset.pattern.permute.xlu0 0
    %239 = vperm.xlu0 %238, %v235
    %v240 = vpop.permute.xlu0 %239
    %243 = vset.pattern.permute.xlu0 0
    %244 = vperm.xlu0 %243, %v236
    %v245 = vpop.permute.xlu0 %244
    %v248 = vsel %vm149, %v233, 0
    %v251 = vsel %vm149, %v234, 0
    %253 = vmatprep.subr.mxu0 0.0
    %254 = vmatpush1.msra.mxu0 %v231
    %255 = vmatprep.subr.mxu0 0.0
    %256 = vmatpush1.msra.mxu0 %v232
    %257 = vmatprep.subr.mxu0 0.0
    %258 = vmatpush1.msra.mxu0 0.0
    %259 = vmatprep.subr.mxu0 0.0
    %260 = vmatpush1.msra.mxu0 0.0
    %261 = vmatprep.subr.mxu0 0.0
    %262 = vmatpush1.msra.mxu0 0.0
    %263 = vmatprep.subr.mxu0 0.0
    %264 = vmatpush1.msra.mxu0 0.0
    %265 = vmatprep.subr.mxu0 0.0
    %266 = vmatpush1.msra.mxu0 0.0
    %267 = vmatprep.subr.mxu0 0.0
    %268 = vmatpush1.msra.mxu0 0.0
    %269 = vmatprep.subr.mxu0 0.0
    %270 = vmatpush1.msra.mxu0 0.0
    %271 = vmatprep.subr.mxu0 0.0
    %272 = vmatpush1.msra.mxu0 0.0
    %273 = vmatprep.subr.mxu0 0.0
    %274 = vmatpush1.msra.mxu0 0.0
    %275 = vmatprep.subr.mxu0 0.0
    %276 = vmatpush1.msra.mxu0 0.0
    %277 = vmatprep.subr.mxu0 0.0
    %278 = vmatpush1.msra.mxu0 0.0
    %279 = vmatprep.subr.mxu0 0.0
    %280 = vmatpush1.msra.mxu0 0.0
    %281 = vmatprep.subr.mxu0 0.0
    %282 = vmatpush1.msra.mxu0 0.0
    %283 = vmatprep.subr.mxu0 0.0
    %284 = vmatpush1.msra.mxu0 0.0
    %285 = vmatprep.subr.mxu0 0.0
    %286 = vmatpush1.msra.mxu0 0.0
    %287 = vmatprep.subr.mxu0 0.0
    %288 = vmatpush1.msra.mxu0 0.0
    %289 = vmatprep.subr.mxu0 0.0
    %290 = vmatpush1.msra.mxu0 0.0
    %291 = vmatprep.subr.mxu0 0.0
    %292 = vmatpush1.msra.mxu0 0.0
    %293 = vmatprep.subr.mxu0 0.0
    %294 = vmatpush1.msra.mxu0 0.0
    %295 = vmatprep.subr.mxu0 0.0
    %296 = vmatpush1.msra.mxu0 0.0
    %297 = vmatprep.subr.mxu0 0.0
    %298 = vmatpush1.msra.mxu0 0.0
    %299 = vmatprep.subr.mxu0 0.0
    %300 = vmatpush1.msra.mxu0 0.0
    %301 = vmatprep.subr.mxu0 0.0
    %302 = vmatpush1.msra.mxu0 0.0
    %303 = vmatprep.subr.mxu0 0.0
    %304 = vmatpush1.msra.mxu0 0.0
    %305 = vmatprep.subr.mxu0 0.0
    %306 = vmatpush1.msra.mxu0 0.0
    %307 = vmatprep.subr.mxu0 0.0
    %308 = vmatpush1.msra.mxu0 0.0
    %309 = vmatprep.subr.mxu0 0.0
    %310 = vmatpush1.msra.mxu0 0.0
    %311 = vmatprep.subr.mxu0 0.0
    %312 = vmatpush1.msra.mxu0 0.0
    %313 = vmatprep.subr.mxu0 0.0
    %314 = vmatpush1.msra.mxu0 0.0
    %315 = vmatprep.subr.mxu0 0.0
    %316 = vmatpush1.msra.mxu0 0.0
    %317 = vmatprep.mubr.f32.mxu0 0.0
    %318 = vmatmul.mubr.f32.gmra.mrb[0].mxu0 %v248
    %v319 = vpop.f32.mrb[0].mxu0
    %v320 = vadd.f32 %v240, %v319
    %v321 = vpop.f32.mrb[0].mxu0
    %322 = vmatprep.mubr.f32.mxu0 0.0
    %323 = vmatmul.mubr.f32.gmra.mrb[0].mxu0 %v251
    %v324 = vpop.f32.mrb[0].mxu0
    %v325 = vadd.f32 %v245, %v324
    %v326 = vpop.f32.mrb[0].mxu0
    %327 = vdwg.mxu0
    %v328 = vmax.f32 %v320, 0.0
    %v329 = vmax.f32 %v325, 0.0
    %v330 = vld [vmem:[%s7] sm:$0x1f]
    %v331 = vld [vmem:[%s8] sm:$0x1f]
    %333 = vset.pattern.permute.xlu0 0
    %334 = vperm.xlu0 %333, %v331
    %v335 = vpop.permute.xlu0 %334
    %v338 = vsel %vm149, %v330, 0
    %340 = vmatprep.subr.mxu0 0.0
    %341 = vmatpush1.msra.mxu0 %v328
    %342 = vmatprep.subr.mxu0 0.0
    %343 = vmatpush1.msra.mxu0 %v329
    %344 = vmatprep.subr.mxu0 0.0
    %345 = vmatpush1.msra.mxu0 0.0
    %346 = vmatprep.subr.mxu0 0.0
    %347 = vmatpush1.msra.mxu0 0.0
    %348 = vmatprep.subr.mxu0 0.0
    %349 = vmatpush1.msra.mxu0 0.0
    %350 = vmatprep.subr.mxu0 0.0
    %351 = vmatpush1.msra.mxu0 0.0
    %352 = vmatprep.subr.mxu0 0.0
    %353 = vmatpush1.msra.mxu0 0.0
    %354 = vmatprep.subr.mxu0 0.0
    %355 = vmatpush1.msra.mxu0 0.0
    %356 = vmatprep.subr.mxu0 0.0
    %357 = vmatpush1.msra.mxu0 0.0
    %358 = vmatprep.subr.mxu0 0.0
    %359 = vmatpush1.msra.mxu0 0.0
    %360 = vmatprep.subr.mxu0 0.0
    %361 = vmatpush1.msra.mxu0 0.0
    %362 = vmatprep.subr.mxu0 0.0
    %363 = vmatpush1.msra.mxu0 0.0
    %364 = vmatprep.subr.mxu0 0.0
    %365 = vmatpush1.msra.mxu0 0.0
    %366 = vmatprep.subr.mxu0 0.0
    %367 = vmatpush1.msra.mxu0 0.0
    %368 = vmatprep.subr.mxu0 0.0
    %369 = vmatpush1.msra.mxu0 0.0
    %370 = vmatprep.subr.mxu0 0.0
    %371 = vmatpush1.msra.mxu0 0.0
    %372 = vmatprep.subr.mxu0 0.0
    %373 = vmatpush1.msra.mxu0 0.0
    %374 = vmatprep.subr.mxu0 0.0
    %375 = vmatpush1.msra.mxu0 0.0
    %376 = vmatprep.subr.mxu0 0.0
    %377 = vmatpush1.msra.mxu0 0.0
    %378 = vmatprep.subr.mxu0 0.0
    %379 = vmatpush1.msra.mxu0 0.0
    %380 = vmatprep.subr.mxu0 0.0
    %381 = vmatpush1.msra.mxu0 0.0
    %382 = vmatprep.subr.mxu0 0.0
    %383 = vmatpush1.msra.mxu0 0.0
    %384 = vmatprep.subr.mxu0 0.0
    %385 = vmatpush1.msra.mxu0 0.0
    %386 = vmatprep.subr.mxu0 0.0
    %387 = vmatpush1.msra.mxu0 0.0
    %388 = vmatprep.subr.mxu0 0.0
    %389 = vmatpush1.msra.mxu0 0.0
    %390 = vmatprep.subr.mxu0 0.0
    %391 = vmatpush1.msra.mxu0 0.0
    %392 = vmatprep.subr.mxu0 0.0
    %393 = vmatpush1.msra.mxu0 0.0
    %394 = vmatprep.subr.mxu0 0.0
    %395 = vmatpush1.msra.mxu0 0.0
    %396 = vmatprep.subr.mxu0 0.0
    %397 = vmatpush1.msra.mxu0 0.0
    %398 = vmatprep.subr.mxu0 0.0
    %399 = vmatpush1.msra.mxu0 0.0
    %400 = vmatprep.subr.mxu0 0.0
    %401 = vmatpush1.msra.mxu0 0.0
    %402 = vmatprep.subr.mxu0 0.0
    %403 = vmatpush1.msra.mxu0 0.0
    %404 = vmatprep.mubr.f32.mxu0 0.0
    %405 = vmatmul.mubr.f32.gmra.mrb[0].mxu0 %v338
    %v406 = vpop.f32.mrb[0].mxu0
    %v407 = vadd.f32 %v335, %v406
    %v408 = vpop.f32.mrb[0].mxu0
    %409 = vdwg.mxu0
    %v410 = vlaneseq
    %v411 = vshrl.u32 %v410, 7
    %vm412 = vcmp.lt.s32.totalorder %v411, 4
    %v413 = vsel %vm412, %v407, -inf
    %vm414 = vcmask 61440
    %v415 = vsel %vm414, %v413, -inf
    %v416 = vrot.slane %v415, 4
    %v417 = vmax.f32 %v415, %v416
    %v418 = vrot.slane %v417, 2
    %v419 = vmax.f32 %v417, %v418
    %v420 = vrot.slane %v419, 1
    %v421 = vmax.f32 %v419, %v420
    %v422 = vsub.f32 %v407, %v421
    %v423 = vsel %vm412, %v422, 0.0
    %v424 = vmul.f32 %v423, 1.442695
    %v425 = vpow.pop %v424
    %v426 = vsel %vm412, %v425, 0.0
    %v427 = vsel %vm414, %v426, 0.0
    %v428 = vrot.slane %v427, 4
    %v429 = vadd.f32 %v427, %v428
    %v430 = vrot.slane %v429, 2
    %v431 = vadd.f32 %v429, %v430
    %v432 = vrot.slane %v431, 1
    %v433 = vadd.f32 %v431, %v432
    %v434 = vrcp.pop %v433
    %v435 = vmul.f32 %v425, %v434
    %v436 = vsel %vm412, %v435, %v407
    %437 = vst.msk [vmem:[#allocation2] sm:$0x1f] %vm414, %v436
    // Predicated region
    $region38: #{tpu_custom_call.1} parent=1 // pred_check
      _
    $region39: #{tpu_custom_call.1} parent=1 // pred_check_branch
      %439 = sbr.rel (0) target = $region41
    $region40: #{tpu_custom_call.1} parent=1 // pred_region
      %s441 = ssub.s32 128, 128
      %442 = vsyncadd [#allocation3], %s441
      %s444 = sshll.u32 [#allocation2], 4
      %s445 = int_to_ptr.vmem [resolvable:$true] %s444
      %447 = dma.vmem_to_hbm [thread:$0]  %s445, 128, %s9, [#allocation3]
    $region41: #{tpu_custom_call.1} parent=1 // pred_fallthru
      _
    // Predicated region
    $region42: #{tpu_custom_call.1} parent=1 // pred_check
      _
    $region43: #{tpu_custom_call.1} parent=1 // pred_check_branch
      %449 = sbr.rel (0) target = $region45
    $region44: #{tpu_custom_call.1} parent=1 // pred_region
      %450 = dma.done [#allocation3], 128
    $region45: #{tpu_custom_call.1} parent=1 // pred_fallthru
      _
    %451 = vsyncpa [#allocation3], 1

</llo_original>
